<compile_context>
chip_gen: v5e
topology: v5e:2x2
jax: 0.10.0
libtpu: 0.0.40
codegen_flags: <defaults>
</compile_context>

<pallas_src>
import jax
import jax.numpy as jnp
from jax.experimental import pallas as pl
from jax.experimental.pallas import tpu as pltpu

EPS = 1e-5          # nn.BatchNorm2d default eps
NEG_SLOPE = 0.2     # nn.LeakyReLU(0.2)
LANE = 128
SUBLANE = 8


def _round_up(x, m):
    return ((x + m - 1) // m) * m


def conv_stats_kernel(p_ref, w_ref, conv_ref, sum_ref, ssq_ref):
    """Phase 1: (TM,Kp)@(Kp,Cp) conv tile + running per-channel sum / sumsq."""
    i = pl.program_id(0)

    conv = jnp.dot(p_ref[...], w_ref[...],
                   preferred_element_type=jnp.float32)      # (TM, Cp) f32
    conv_ref[...] = conv

    @pl.when(i == 0)
    def _():
        sum_ref[...] = jnp.zeros_like(sum_ref)
        ssq_ref[...] = jnp.zeros_like(ssq_ref)

    sum_ref[...] += jnp.sum(conv, axis=0, keepdims=True)
    ssq_ref[...] += jnp.sum(conv * conv, axis=0, keepdims=True)


def bn_act_kernel(conv_ref, scale_ref, shift_ref, o_ref):
    """Phase 2: folded BatchNorm (one FMA per element) + LeakyReLU(0.2)."""
    y = conv_ref[...] * scale_ref[...] + shift_ref[...]
    o_ref[...] = jnp.where(y >= 0, y, NEG_SLOPE * y).astype(o_ref.dtype)


def genblock_forward(x_nchw, weight, gamma, beta, *, stride=2, pad=1, tm=512):
    """GenBlock forward (down=True, batchNorm=True, dropout=False).

    x_nchw : (N, Cin, H, W) float32, NCHW (PyTorch convention)
    weight : (Cout, Cin, KH, KW)  Conv2d weight, bias=False
    gamma/beta : (Cout,) BatchNorm affine params
    returns: (N, Cout, H//2, W//2) NCHW float32
    """
    N, Cin, H, W = x_nchw.shape
    Cout, _, KH, KW = weight.shape
    Ho = (H + 2 * pad - KH) // stride + 1
    Wo = (W + 2 * pad - KW) // stride + 1
    M = N * Ho * Wo
    K = KH * KW * Cin

    # ---- tile / padding geometry: lane-dense channels, sublane-aligned rows ----
    Cp = _round_up(Cout, LANE)                    # lane-dense output channels
    Kp = _round_up(K, LANE)                       # lane-aligned contraction dim
    TM = min(tm, _round_up(M, SUBLANE))
    TM = max(SUBLANE, (TM // SUBLANE) * SUBLANE)  # sublane-aligned row tile
    Mp = _round_up(M, TM)
    n_tiles = Mp // TM

    # ---- glue: NCHW -> NHWC, zero-pad, im2col (4x4 stride-2 patches) ----
    # TODO(synk): for large layers, fuse patch extraction into the kernel as
    # KH*KW shifted (TM,Cin)x(Cin,Cout) matmuls to avoid the im2col HBM blow-up.
    x = jnp.transpose(x_nchw, (0, 2, 3, 1))
    xp = jnp.pad(x, ((0, 0), (pad, pad), (pad, pad), (0, 0)))
    cols = []
    for i in range(KH):
        for j in range(KW):
            cols.append(xp[:, i:i + stride * Ho:stride, j:j + stride * Wo:stride, :])
    patches = jnp.stack(cols, axis=3)                      # (N, Ho, Wo, KH*KW, Cin)
    p_mat = patches.reshape(M, K)
    # zero rows/cols are harmless (stats divide by the true M); cast matmul
    # operands to bf16 (MXU native) with f32 accumulation in-kernel.
    p_mat = jnp.pad(p_mat, ((0, Mp - M), (0, Kp - K))).astype(jnp.bfloat16)

    # conv weight (Cout, Cin, KH, KW) -> (KH, KW, Cin, Cout) -> (Kp, Cp)
    w_mat = jnp.transpose(weight, (2, 3, 1, 0)).reshape(K, Cout)
    w_mat = jnp.pad(w_mat, ((0, Kp - K), (0, Cp - Cout))).astype(jnp.bfloat16)

    # explicit VMEM budget (double-buffered p & conv tiles + resident weight)
    vmem_need = 2 * (TM * Kp * 2 + TM * Cp * 4) + 2 * Kp * Cp * 2 + 8 * Cp * 4
    vmem_limit = int(min(max(2 * vmem_need, 4 << 20), 32 << 20))

    # ---- phase 1: tiled conv matmul + per-channel sum / sum-of-squares ----
    conv_flat, ch_sum, ch_ssq = pl.pallas_call(
        conv_stats_kernel,
        out_shape=(
            jax.ShapeDtypeStruct((Mp, Cp), jnp.float32),
            jax.ShapeDtypeStruct((1, Cp), jnp.float32),
            jax.ShapeDtypeStruct((1, Cp), jnp.float32),
        ),
        grid_spec=pltpu.PrefetchScalarGridSpec(
            num_scalar_prefetch=0,
            grid=(n_tiles,),
            in_specs=[
                pl.BlockSpec((TM, Kp), lambda i: (i, 0)),
                pl.BlockSpec((Kp, Cp), lambda i: (0, 0)),   # weight stays resident
            ],
            out_specs=(
                pl.BlockSpec((TM, Cp), lambda i: (i, 0)),
                pl.BlockSpec((1, Cp), lambda i: (0, 0)),    # stats accumulators
                pl.BlockSpec((1, Cp), lambda i: (0, 0)),
            ),
        ),
        compiler_params=pltpu.CompilerParams(
            dimension_semantics=("arbitrary",),             # stats reduction axis
            vmem_limit_bytes=vmem_limit),
        cost_estimate=pl.CostEstimate(
            flops=2 * Mp * Kp * Cp,
            transcendentals=0,
            bytes_accessed=Mp * Kp * 2 + Kp * Cp * 2 + Mp * Cp * 4),
    )(p_mat, w_mat)

    # ---- fold BatchNorm (training-mode batch stats) into one scale/shift ----
    mean = ch_sum / M
    var = jnp.maximum(ch_ssq / M - mean * mean, 0.0)        # biased var (PyTorch BN)
    g = jnp.pad(gamma.astype(jnp.float32), (0, Cp - Cout)).reshape(1, Cp)
    b = jnp.pad(beta.astype(jnp.float32), (0, Cp - Cout)).reshape(1, Cp)
    scale = g * jax.lax.rsqrt(var + EPS)
    shift = b - mean * scale

    # ---- phase 2: normalize + affine + LeakyReLU, M-parallel across TCs ----
    out_flat = pl.pallas_call(
        bn_act_kernel,
        out_shape=jax.ShapeDtypeStruct((Mp, Cp), jnp.float32),
        grid_spec=pltpu.PrefetchScalarGridSpec(
            num_scalar_prefetch=0,
            grid=(n_tiles,),
            in_specs=[
                pl.BlockSpec((TM, Cp), lambda i: (i, 0)),
                pl.BlockSpec((1, Cp), lambda i: (0, 0)),
                pl.BlockSpec((1, Cp), lambda i: (0, 0)),
            ],
            out_specs=pl.BlockSpec((TM, Cp), lambda i: (i, 0)),
        ),
        compiler_params=pltpu.CompilerParams(
            dimension_semantics=("parallel",),
            vmem_limit_bytes=vmem_limit),
        cost_estimate=pl.CostEstimate(
            flops=4 * Mp * Cp,
            transcendentals=0,
            bytes_accessed=2 * Mp * Cp * 4),
    )(conv_flat, scale, shift)

    # drop row/channel padding, rows are (n, ho, wo) ordered -> NHWC -> NCHW
    out = out_flat[:M, :Cout].reshape(N, Ho, Wo, Cout).transpose(0, 3, 1, 2)
    return out


def genblock_reference(x, w, gamma, beta, *, conv_dtype=jnp.float32):
    """Pure-JAX reference. conv_dtype=bfloat16 matches the kernel's MXU precision."""
    conv = jax.lax.conv_general_dilated(
        x.astype(conv_dtype), w.astype(conv_dtype),
        window_strides=(2, 2), padding=((1, 1), (1, 1)),
        dimension_numbers=("NCHW", "OIHW", "NCHW"),
        preferred_element_type=jnp.float32)
    mean = conv.mean(axis=(0, 2, 3), keepdims=True)
    var = ((conv - mean) ** 2).mean(axis=(0, 2, 3), keepdims=True)
    y = (conv - mean) * jax.lax.rsqrt(var + EPS)
    y = y * gamma.reshape(1, -1, 1, 1) + beta.reshape(1, -1, 1, 1)
    return jnp.where(y >= 0, y, NEG_SLOPE * y)


if __name__ == "__main__":
    # small shapes consistent with the module: N=2, Cin=4, H=W=16, Cout=8
    N, Cin, H, W, Cout = 2, 4, 16, 16, 8
    key = jax.random.PRNGKey(0)
    kx, kw = jax.random.split(key)

    x = jax.random.normal(kx, (N, Cin, H, W), dtype=jnp.float32)
    weight = jax.random.normal(kw, (Cout, Cin, 4, 4), dtype=jnp.float32) * 0.1
    gamma = jnp.ones((Cout,), dtype=jnp.float32)   # BatchNorm2d default init
    beta = jnp.zeros((Cout,), dtype=jnp.float32)

    out = jax.block_until_ready(genblock_forward(x, weight, gamma, beta))
    assert out.shape == (N, Cout, H // 2, W // 2), out.shape

    # strict check vs a reference using the same bf16 matmul precision,
    # loose check vs the full-f32 reference (bf16 operand rounding only).
    ref_matched = genblock_reference(x, weight, gamma, beta, conv_dtype=jnp.bfloat16)
    ref_f32 = genblock_reference(x, weight, gamma, beta, conv_dtype=jnp.float32)
    err_matched = float(jnp.max(jnp.abs(out - ref_matched)))
    err_f32 = float(jnp.max(jnp.abs(out - ref_f32)))
    assert err_matched < 5e-3, f"mismatch vs bf16-matched reference: {err_matched}"
    assert err_f32 < 5e-2, f"mismatch vs f32 reference: {err_f32}"

    print("KERNEL_OK")
</pallas_src>

<mosaic_0001>
module attributes {stable_mosaic.version = 11 : i64} {
  func.func @conv_stats_kernel(%arg0: i32, %arg1: memref<128x128xbf16, #tpu.memory_space<vmem>>, %arg2: memref<128x128xbf16, #tpu.memory_space<vmem>>, %arg3: memref<128x128xf32, #tpu.memory_space<vmem>>, %arg4: memref<1x128xf32, #tpu.memory_space<vmem>>, %arg5: memref<1x128xf32, #tpu.memory_space<vmem>>) attributes {dimension_semantics = [#tpu.dimension_semantics<arbitrary>], iteration_bounds = array<i64: 1>, scalar_prefetch = 0 : i64, scratch_operands = 0 : i64, tpu.core_type = #tpu.core_type<tc>, window_params = [{transform_indices = @transform_0, window_bounds = array<i64: 128, 128>}, {pipeline_mode = #tpu.pipeline_mode<synchronous>, transform_indices = @transform_1, window_bounds = array<i64: 128, 128>}, {transform_indices = @transform_2, window_bounds = array<i64: 128, 128>}, {pipeline_mode = #tpu.pipeline_mode<synchronous>, transform_indices = @transform_3, window_bounds = array<i64: 1, 128>}, {pipeline_mode = #tpu.pipeline_mode<synchronous>, transform_indices = @transform_4, window_bounds = array<i64: 1, 128>}]} {
    %c0 = arith.constant 0 : index
    %c0_0 = arith.constant 0 : index
    %0 = vector.load %arg1[%c0, %c0_0] : memref<128x128xbf16, #tpu.memory_space<vmem>>, vector<128x128xbf16>
    %c0_1 = arith.constant 0 : index
    %c0_2 = arith.constant 0 : index
    %1 = vector.load %arg2[%c0_1, %c0_2] : memref<128x128xbf16, #tpu.memory_space<vmem>>, vector<128x128xbf16>
    %cst = arith.constant dense<0.000000e+00> : vector<128x128xf32>
    %2 = tpu.matmul %0, %1, %cst {dimension_numbers = #tpu.dot_dimension_numbers<[1], [0], [0], [1], [0, 0, 1, 1], [], []>} : vector<128x128xbf16>, vector<128x128xbf16>, vector<128x128xf32> -> vector<128x128xf32>
    %c0_3 = arith.constant 0 : index
    %c0_4 = arith.constant 0 : index
    %3 = vector.load %arg3[%c0_3, %c0_4] : memref<128x128xf32, #tpu.memory_space<vmem>>, vector<128x128xf32>
    tpu.vector_store %arg3[%c0_3, %c0_4], %2 {strides = array<i32>} : memref<128x128xf32, #tpu.memory_space<vmem>>, vector<128x128xf32>,
    %c0_i32 = arith.constant 0 : i32
    %4 = arith.cmpi eq, %arg0, %c0_i32 : i32
    %5 = arith.extui %4 : i1 to i32
    %c0_i32_5 = arith.constant 0 : i32
    %6 = arith.cmpi ne, %5, %c0_i32_5 : i32
    scf.if %6 {
      %cst_16 = arith.constant 0.000000e+00 : f32
      %18 = vector.broadcast %cst_16 : f32 to vector<1x128xf32>
      %c0_17 = arith.constant 0 : index
      %c0_18 = arith.constant 0 : index
      %19 = vector.load %arg4[%c0_17, %c0_18] : memref<1x128xf32, #tpu.memory_space<vmem>>, vector<1x128xf32>
      tpu.vector_store %arg4[%c0_17, %c0_18], %18 {strides = array<i32>} : memref<1x128xf32, #tpu.memory_space<vmem>>, vector<1x128xf32>,
      %cst_19 = arith.constant 0.000000e+00 : f32
      %20 = vector.broadcast %cst_19 : f32 to vector<1x128xf32>
      %c0_20 = arith.constant 0 : index
      %c0_21 = arith.constant 0 : index
      %21 = vector.load %arg5[%c0_20, %c0_21] : memref<1x128xf32, #tpu.memory_space<vmem>>, vector<1x128xf32>
      tpu.vector_store %arg5[%c0_20, %c0_21], %20 {strides = array<i32>} : memref<1x128xf32, #tpu.memory_space<vmem>>, vector<1x128xf32>,
    } else {
    }
    %c0_6 = arith.constant 0 : index
    %c0_7 = arith.constant 0 : index
    %7 = vector.load %arg4[%c0_6, %c0_7] : memref<1x128xf32, #tpu.memory_space<vmem>>, vector<1x128xf32>
    %cst_8 = arith.constant dense<0.000000e+00> : vector<128xf32>
    %8 = vector.multi_reduction <add>, %2, %cst_8 [0] : vector<128x128xf32> to vector<128xf32>
    %9 = vector.shape_cast %8 : vector<128xf32> to vector<1x128xf32>
    %10 = arith.addf %7, %9 : vector<1x128xf32>
    %c0_9 = arith.constant 0 : index
    %c0_10 = arith.constant 0 : index
    %11 = vector.load %arg4[%c0_9, %c0_10] : memref<1x128xf32, #tpu.memory_space<vmem>>, vector<1x128xf32>
    tpu.vector_store %arg4[%c0_9, %c0_10], %10 {strides = array<i32>} : memref<1x128xf32, #tpu.memory_space<vmem>>, vector<1x128xf32>,
    %c0_11 = arith.constant 0 : index
    %c0_12 = arith.constant 0 : index
    %12 = vector.load %arg5[%c0_11, %c0_12] : memref<1x128xf32, #tpu.memory_space<vmem>>, vector<1x128xf32>
    %13 = arith.mulf %2, %2 : vector<128x128xf32>
    %cst_13 = arith.constant dense<0.000000e+00> : vector<128xf32>
    %14 = vector.multi_reduction <add>, %13, %cst_13 [0] : vector<128x128xf32> to vector<128xf32>
    %15 = vector.shape_cast %14 : vector<128xf32> to vector<1x128xf32>
    %16 = arith.addf %12, %15 : vector<1x128xf32>
    %c0_14 = arith.constant 0 : index
    %c0_15 = arith.constant 0 : index
    %17 = vector.load %arg5[%c0_14, %c0_15] : memref<1x128xf32, #tpu.memory_space<vmem>>, vector<1x128xf32>
    tpu.vector_store %arg5[%c0_14, %c0_15], %16 {strides = array<i32>} : memref<1x128xf32, #tpu.memory_space<vmem>>, vector<1x128xf32>,
    return
  }
  func.func @transform_0(%arg0: i32) -> (i32, i32) {
    %c0_i32 = arith.constant 0 : i32
    %c0_i32_0 = arith.constant 0 : i32
    return %arg0, %c0_i32 : i32, i32
  }
  func.func @transform_1(%arg0: i32) -> (i32, i32) {
    %c0_i32 = arith.constant 0 : i32
    %c0_i32_0 = arith.constant 0 : i32
    %c0_i32_1 = arith.constant 0 : i32
    return %c0_i32, %c0_i32_0 : i32, i32
  }
  func.func @transform_2(%arg0: i32) -> (i32, i32) {
    %c0_i32 = arith.constant 0 : i32
    %c0_i32_0 = arith.constant 0 : i32
    return %arg0, %c0_i32 : i32, i32
  }
  func.func @transform_3(%arg0: i32) -> (i32, i32) {
    %c0_i32 = arith.constant 0 : i32
    %c0_i32_0 = arith.constant 0 : i32
    %c0_i32_1 = arith.constant 0 : i32
    return %c0_i32, %c0_i32_0 : i32, i32
  }
  func.func @transform_4(%arg0: i32) -> (i32, i32) {
    %c0_i32 = arith.constant 0 : i32
    %c0_i32_0 = arith.constant 0 : i32
    %c0_i32_1 = arith.constant 0 : i32
    return %c0_i32, %c0_i32_0 : i32, i32
  }
}

</mosaic_0001>

<llo_original>
// kernel: tpu_custom_call.1
$region0: #{tpu_custom_call.1}
  #allocation0 [shape = 'u32[]', space=smem, size = 0x4, offset = 0x4, fixed_abs, tag = 'smem constant byte address 0x4 - core index']
  #allocation1 [shape = 'u32[72,128]{1,0:T(1,128)}', space=vmem, size = 0x9000, scoped, tag = 'internal scratch']
  %s0 = inlined_call_operand.hbm [shape: bf16[128,128], index: 0, kind: input, shape index: {}]
  %s1 = inlined_call_operand.hbm [shape: bf16[128,128], index: 1, kind: input, shape index: {}]
  %s2 = inlined_call_operand.hbm [shape: f32[128,128], index: 2, kind: output, shape index: {0}]
  %s3 = inlined_call_operand.hbm [shape: f32[1,128], index: 3, kind: output, shape index: {1}]
  %s4 = inlined_call_operand.hbm [shape: f32[1,128], index: 4, kind: output, shape index: {2}]
  %5 = xla_tuple %s2, %s3, %s4
  %s6 = sld [smem:[#allocation0]]
  $region46: #{tpu_custom_call.1} parent=0
    _
  %s8 = ssub.s32 1, %s6
  %s9 = scalar_select 0, %s8, %s6
  $region1: #{tpu_custom_call.1} parent=0
    #allocation2 [shape = 'u8[32768]{0}', space=vmem, size = 0x8000, scoped, tag = 'input window, operand 0, single buffered']
    #allocation3 [shape = 's32[1]{0}', space=sflag, size = 0x4, scoped, tag = 'scoped memory for tpu_custom_call.1']
    #allocation4 [shape = 's32[1]{0}', space=sflag, size = 0x4, scoped, tag = 'scoped memory for tpu_custom_call.1']
    #allocation5 [shape = 'u8[32768]{0}', space=vmem, size = 0x8000, scoped, tag = 'input window, operand 1, single buffered']
    #allocation6 [shape = 's32[1]{0}', space=sflag, size = 0x4, scoped, tag = 'scoped memory for tpu_custom_call.1']
    #allocation7 [shape = 'u8[65536]{0}', space=vmem, size = 0x10000, scoped, tag = 'output window, operand 0, single buffered']
    #allocation8 [shape = 'u8[512]{0}', space=vmem, size = 0x400, scoped, tag = 'output window, operand 1, single buffered']
    #allocation9 [shape = 's32[1]{0}', space=sflag, size = 0x4, scoped, tag = 'scoped memory for tpu_custom_call.1']
    #allocation10 [shape = 'u8[512]{0}', space=vmem, size = 0x400, scoped, tag = 'output window, operand 2, single buffered']
    %10 = vsyncpa [#allocation3], 0
    %11 = vsyncpa [#allocation6], 0
    %12 = vsyncpa [#allocation4], 0
    %13 = vsyncpa [#allocation9], 0
    // Predicated region
    $region2: #{tpu_custom_call.1} parent=1 // pred_check
      _
    $region3: #{tpu_custom_call.1} parent=1 // pred_check_branch
      %15 = sbr.rel (0) target = $region5
    $region4: #{tpu_custom_call.1} parent=1 // pred_region
      %17 = vsyncadd [#allocation3], 0
      %s18 = sshll.u32 %s0, 4
      %s19 = int_to_ptr.hbm [resolvable:$true] %s18
      %s20 = sshll.u32 [#allocation2], 4
      %s21 = int_to_ptr.vmem [resolvable:$true] %s20
      %26 = dma.hbm_to_vmem [thread:$0]  %s19, 1024, %s21, [#allocation3], 64, 64, 4
    $region5: #{tpu_custom_call.1} parent=1 // pred_fallthru
      _
    // Predicated region
    $region6: #{tpu_custom_call.1} parent=1 // pred_check
      _
    $region7: #{tpu_custom_call.1} parent=1 // pred_check_branch
      %28 = sbr.rel (0) target = $region9
    $region8: #{tpu_custom_call.1} parent=1 // pred_region
      %30 = vsyncadd [#allocation6], 0
      %s31 = sshll.u32 %s1, 4
      %s32 = int_to_ptr.hbm [resolvable:$true] %s31
      %s33 = sshll.u32 [#allocation5], 4
      %s34 = int_to_ptr.vmem [resolvable:$true] %s33
      %39 = dma.hbm_to_vmem [thread:$0]  %s32, 1024, %s34, [#allocation6], 64, 64, 4
    $region9: #{tpu_custom_call.1} parent=1 // pred_fallthru
      _
    // Predicated region
    $region10: #{tpu_custom_call.1} parent=1 // pred_check
      _
    $region11: #{tpu_custom_call.1} parent=1 // pred_check_branch
      %41 = sbr.rel (0) target = $region13
    $region12: #{tpu_custom_call.1} parent=1 // pred_region
      %43 = dma.done [#allocation3], 1024
    $region13: #{tpu_custom_call.1} parent=1 // pred_fallthru
      _
    // Predicated region
    $region14: #{tpu_custom_call.1} parent=1 // pred_check
      _
    $region15: #{tpu_custom_call.1} parent=1 // pred_check_branch
      %45 = sbr.rel (0) target = $region17
    $region16: #{tpu_custom_call.1} parent=1 // pred_region
      %47 = dma.done [#allocation6], 1024
    $region17: #{tpu_custom_call.1} parent=1 // pred_fallthru
      _
    %v48 = vld [vmem:[#allocation2] sm:$0xf]
    %v49 = vld [vmem:[#allocation2 + $0x4] sm:$0xf]
    %v50 = vld [vmem:[#allocation2 + $0x8] sm:$0xf]
    %v51 = vld [vmem:[#allocation2 + $0xc] sm:$0xf]
    %v52 = vld [vmem:[#allocation2 + $0x10] sm:$0xf]
    %v53 = vld [vmem:[#allocation2 + $0x14] sm:$0xf]
    %v54 = vld [vmem:[#allocation2 + $0x18] sm:$0xf]
    %v55 = vld [vmem:[#allocation2 + $0x1c] sm:$0xf]
    %v56 = vld [vmem:[#allocation2 + $0x20] sm:$0xf]
    %v57 = vld [vmem:[#allocation2 + $0x24] sm:$0xf]
    %v58 = vld [vmem:[#allocation2 + $0x28] sm:$0xf]
    %v59 = vld [vmem:[#allocation2 + $0x2c] sm:$0xf]
    %v60 = vld [vmem:[#allocation2 + $0x30] sm:$0xf]
    %v61 = vld [vmem:[#allocation2 + $0x34] sm:$0xf]
    %v62 = vld [vmem:[#allocation2 + $0x38] sm:$0xf]
    %v63 = vld [vmem:[#allocation2 + $0x3c] sm:$0xf]
    %v64 = vld [vmem:[#allocation5] sm:$0xf]
    %v65 = vld [vmem:[#allocation5 + $0x4] sm:$0xf]
    %v66 = vld [vmem:[#allocation5 + $0x8] sm:$0xf]
    %v67 = vld [vmem:[#allocation5 + $0xc] sm:$0xf]
    %v68 = vld [vmem:[#allocation5 + $0x10] sm:$0xf]
    %v69 = vld [vmem:[#allocation5 + $0x14] sm:$0xf]
    %v70 = vld [vmem:[#allocation5 + $0x18] sm:$0xf]
    %v71 = vld [vmem:[#allocation5 + $0x1c] sm:$0xf]
    %v72 = vld [vmem:[#allocation5 + $0x20] sm:$0xf]
    %v73 = vld [vmem:[#allocation5 + $0x24] sm:$0xf]
    %v74 = vld [vmem:[#allocation5 + $0x28] sm:$0xf]
    %v75 = vld [vmem:[#allocation5 + $0x2c] sm:$0xf]
    %v76 = vld [vmem:[#allocation5 + $0x30] sm:$0xf]
    %v77 = vld [vmem:[#allocation5 + $0x34] sm:$0xf]
    %v78 = vld [vmem:[#allocation5 + $0x38] sm:$0xf]
    %v79 = vld [vmem:[#allocation5 + $0x3c] sm:$0xf]
    %v96 = vunpack.c.l.b16 %v48
    %v97 = vunpack.c.l.b16 %v49
    %v98 = vunpack.c.l.b16 %v50
    %v99 = vunpack.c.l.b16 %v51
    %v100 = vunpack.c.l.b16 %v52
    %v101 = vunpack.c.l.b16 %v53
    %v102 = vunpack.c.l.b16 %v54
    %v103 = vunpack.c.l.b16 %v55
    %v104 = vunpack.c.l.b16 %v56
    %v105 = vunpack.c.l.b16 %v57
    %v106 = vunpack.c.l.b16 %v58
    %v107 = vunpack.c.l.b16 %v59
    %v108 = vunpack.c.l.b16 %v60
    %v109 = vunpack.c.l.b16 %v61
    %v110 = vunpack.c.l.b16 %v62
    %v111 = vunpack.c.l.b16 %v63
    %v112 = vpack.c.b16 %v97, %v96
    %v113 = vpack.c.b16 %v99, %v98
    %v114 = vpack.c.b16 %v101, %v100
    %v115 = vpack.c.b16 %v103, %v102
    %v116 = vpack.c.b16 %v105, %v104
    %v117 = vpack.c.b16 %v107, %v106
    %v118 = vpack.c.b16 %v109, %v108
    %v119 = vpack.c.b16 %v111, %v110
    %v144 = vunpack.c.l.b16 %v64
    %v145 = vunpack.c.l.b16 %v65
    %v146 = vunpack.c.l.b16 %v66
    %v147 = vunpack.c.l.b16 %v67
    %v148 = vunpack.c.l.b16 %v68
    %v149 = vunpack.c.l.b16 %v69
    %v150 = vunpack.c.l.b16 %v70
    %v151 = vunpack.c.l.b16 %v71
    %v152 = vunpack.c.l.b16 %v72
    %v153 = vunpack.c.l.b16 %v73
    %v154 = vunpack.c.l.b16 %v74
    %v155 = vunpack.c.l.b16 %v75
    %v156 = vunpack.c.l.b16 %v76
    %v157 = vunpack.c.l.b16 %v77
    %v158 = vunpack.c.l.b16 %v78
    %v159 = vunpack.c.l.b16 %v79
    %v160 = vpack.c.b16 %v145, %v144
    %v161 = vpack.c.b16 %v147, %v146
    %v162 = vpack.c.b16 %v149, %v148
    %v163 = vpack.c.b16 %v151, %v150
    %v164 = vpack.c.b16 %v153, %v152
    %v165 = vpack.c.b16 %v155, %v154
    %v166 = vpack.c.b16 %v157, %v156
    %v167 = vpack.c.b16 %v159, %v158
    %176 = vmatpush.bf16.msra.mxu0 %v167
    %177 = vmatpush.bf16.msra.mxu0 %v166
    %178 = vmatpush.bf16.msra.mxu0 %v165
    %179 = vmatpush.bf16.msra.mxu0 %v164
    %180 = vmatpush.bf16.msra.mxu0 %v163
    %181 = vmatpush.bf16.msra.mxu0 %v162
    %182 = vmatpush.bf16.msra.mxu0 %v161
    %183 = vmatpush.bf16.msra.mxu0 %v160
    %184 = vmatmul.bf16.gmra.mxu0 %v112
    %v185 = vpop.f32.mrf.mxu0
    %v186 = vadd.f32 0.0, %v185
    %v187 = vpop.f32.mrf.mxu0
    %v188 = vadd.f32 0.0, %v187
    %189 = vmatmul.bf16.gmra.mxu0 %v113
    %v190 = vpop.f32.mrf.mxu0
    %v191 = vadd.f32 0.0, %v190
    %v192 = vpop.f32.mrf.mxu0
    %v193 = vadd.f32 0.0, %v192
    %194 = vmatmul.bf16.gmra.mxu0 %v114
    %v195 = vpop.f32.mrf.mxu0
    %v196 = vadd.f32 0.0, %v195
    %v197 = vpop.f32.mrf.mxu0
    %v198 = vadd.f32 0.0, %v197
    %199 = vmatmul.bf16.gmra.mxu0 %v115
    %v200 = vpop.f32.mrf.mxu0
    %v201 = vadd.f32 0.0, %v200
    %v202 = vpop.f32.mrf.mxu0
    %v203 = vadd.f32 0.0, %v202
    %204 = vmatmul.bf16.gmra.mxu0 %v116
    %v205 = vpop.f32.mrf.mxu0
    %v206 = vadd.f32 0.0, %v205
    %v207 = vpop.f32.mrf.mxu0
    %v208 = vadd.f32 0.0, %v207
    %209 = vmatmul.bf16.gmra.mxu0 %v117
    %v210 = vpop.f32.mrf.mxu0
    %v211 = vadd.f32 0.0, %v210
    %v212 = vpop.f32.mrf.mxu0
    %v213 = vadd.f32 0.0, %v212
    %214 = vmatmul.bf16.gmra.mxu0 %v118
    %v215 = vpop.f32.mrf.mxu0
    %v216 = vadd.f32 0.0, %v215
    %v217 = vpop.f32.mrf.mxu0
    %v218 = vadd.f32 0.0, %v217
    %219 = vmatmul.bf16.gmra.mxu0 %v119
    %v220 = vpop.f32.mrf.mxu0
    %v221 = vadd.f32 0.0, %v220
    %v222 = vpop.f32.mrf.mxu0
    %v223 = vadd.f32 0.0, %v222
    %224 = vdwg.mxu0
    %225 = vst [vmem:[#allocation7] sm:$0xff] %v186
    %226 = vst [vmem:[#allocation7 + $0x8] sm:$0xff] %v188
    %227 = vst [vmem:[#allocation7 + $0x10] sm:$0xff] %v191
    %228 = vst [vmem:[#allocation7 + $0x18] sm:$0xff] %v193
    %229 = vst [vmem:[#allocation7 + $0x20] sm:$0xff] %v196
    %230 = vst [vmem:[#allocation7 + $0x28] sm:$0xff] %v198
    %231 = vst [vmem:[#allocation7 + $0x30] sm:$0xff] %v201
    %232 = vst [vmem:[#allocation7 + $0x38] sm:$0xff] %v203
    %233 = vst [vmem:[#allocation7 + $0x40] sm:$0xff] %v206
    %234 = vst [vmem:[#allocation7 + $0x48] sm:$0xff] %v208
    %235 = vst [vmem:[#allocation7 + $0x50] sm:$0xff] %v211
    %236 = vst [vmem:[#allocation7 + $0x58] sm:$0xff] %v213
    %237 = vst [vmem:[#allocation7 + $0x60] sm:$0xff] %v216
    %238 = vst [vmem:[#allocation7 + $0x68] sm:$0xff] %v218
    %239 = vst [vmem:[#allocation7 + $0x70] sm:$0xff] %v221
    %240 = vst [vmem:[#allocation7 + $0x78] sm:$0xff] %v223
    %p241 = scmp.eq.s32.totalorder 0, 0
    // Predicated region
    $region18: #{tpu_custom_call.1} parent=1 // pred_check
      %p242 = pneg %p241
    $region19: #{tpu_custom_call.1} parent=1 // pred_check_branch
      %244 = sbr.rel (%p242) target = $region21
    $region20: #{tpu_custom_call.1} parent=1 // pred_region
      %245 = vst [vmem:[#allocation8] sm:$0x1] 0.0
      %246 = vst [vmem:[#allocation10] sm:$0x1] 0.0
    $region21: #{tpu_custom_call.1} parent=1 // pred_fallthru
      _
    %v247 = vld [vmem:[#allocation8] sm:$0x1]
    %v248 = vadd.f32 %v186, %v188
    %v249 = vadd.f32 %v248, %v191
    %v250 = vadd.f32 %v249, %v193
    %v251 = vadd.f32 %v250, %v196
    %v252 = vadd.f32 %v251, %v198
    %v253 = vadd.f32 %v252, %v201
    %v254 = vadd.f32 %v253, %v203
    %v255 = vadd.f32 %v254, %v206
    %v256 = vadd.f32 %v255, %v208
    %v257 = vadd.f32 %v256, %v211
    %v258 = vadd.f32 %v257, %v213
    %v259 = vadd.f32 %v258, %v216
    %v260 = vadd.f32 %v259, %v218
    %v261 = vadd.f32 %v260, %v221
    %v262 = vadd.f32 %v261, %v223
    %v263 = vrot.slane %v262, 4
    %v264 = vadd.f32 %v262, %v263
    %v265 = vrot.slane %v264, 2
    %v266 = vadd.f32 %v264, %v265
    %v267 = vrot.slane %v266, 1
    %v268 = vadd.f32 %v266, %v267
    %v269 = vadd.f32 %v247, %v268
    %270 = vst [vmem:[#allocation8] sm:$0x1] %v269
    %v271 = vld [vmem:[#allocation10] sm:$0x1]
    %v272 = vmul.f32 %v186, %v186
    %v273 = vmul.f32 %v188, %v188
    %v274 = vmul.f32 %v191, %v191
    %v275 = vmul.f32 %v193, %v193
    %v276 = vmul.f32 %v196, %v196
    %v277 = vmul.f32 %v198, %v198
    %v278 = vmul.f32 %v201, %v201
    %v279 = vmul.f32 %v203, %v203
    %v280 = vmul.f32 %v206, %v206
    %v281 = vmul.f32 %v208, %v208
    %v282 = vmul.f32 %v211, %v211
    %v283 = vmul.f32 %v213, %v213
    %v284 = vmul.f32 %v216, %v216
    %v285 = vmul.f32 %v218, %v218
    %v286 = vmul.f32 %v221, %v221
    %v287 = vmul.f32 %v223, %v223
    %v288 = vadd.f32 %v272, %v273
    %v289 = vadd.f32 %v288, %v274
    %v290 = vadd.f32 %v289, %v275
    %v291 = vadd.f32 %v290, %v276
    %v292 = vadd.f32 %v291, %v277
    %v293 = vadd.f32 %v292, %v278
    %v294 = vadd.f32 %v293, %v279
    %v295 = vadd.f32 %v294, %v280
    %v296 = vadd.f32 %v295, %v281
    %v297 = vadd.f32 %v296, %v282
    %v298 = vadd.f32 %v297, %v283
    %v299 = vadd.f32 %v298, %v284
    %v300 = vadd.f32 %v299, %v285
    %v301 = vadd.f32 %v300, %v286
    %v302 = vadd.f32 %v301, %v287
    %v303 = vrot.slane %v302, 4
    %v304 = vadd.f32 %v302, %v303
    %v305 = vrot.slane %v304, 2
    %v306 = vadd.f32 %v304, %v305
    %v307 = vrot.slane %v306, 1
    %v308 = vadd.f32 %v306, %v307
    %v309 = vadd.f32 %v271, %v308
    %310 = vst [vmem:[#allocation10] sm:$0x1] %v309
    // Predicated region
    $region22: #{tpu_custom_call.1} parent=1 // pred_check
      _
    $region23: #{tpu_custom_call.1} parent=1 // pred_check_branch
      %312 = sbr.rel (0) target = $region25
    $region24: #{tpu_custom_call.1} parent=1 // pred_region
      %314 = vsyncadd [#allocation4], 0
      %s315 = sshll.u32 [#allocation7], 4
      %s316 = int_to_ptr.vmem [resolvable:$true] %s315
      %s317 = sshll.u32 %s2, 4
      %s318 = int_to_ptr.hbm [resolvable:$true] %s317
      %323 = dma.vmem_to_hbm [thread:$0]  %s316, 2048, %s318, [#allocation4], 128, 128, 8
    $region25: #{tpu_custom_call.1} parent=1 // pred_fallthru
      _
    // Predicated region
    $region26: #{tpu_custom_call.1} parent=1 // pred_check
      _
    $region27: #{tpu_custom_call.1} parent=1 // pred_check_branch
      %325 = sbr.rel (0) target = $region29
    $region28: #{tpu_custom_call.1} parent=1 // pred_region
      %327 = vsyncadd [#allocation9], 0
      %s329 = sshll.u32 [#allocation8], 4
      %s330 = int_to_ptr.vmem [resolvable:$true] %s329
      %s331 = sshll.u32 %s3, 4
      %s332 = int_to_ptr.hbm [resolvable:$true] %s331
      %334 = dma.vmem_to_hbm [thread:$0]  %s330, 16, %s332, [#allocation9]
    $region29: #{tpu_custom_call.1} parent=1 // pred_fallthru
      _
    // Predicated region
    $region30: #{tpu_custom_call.1} parent=1 // pred_check
      _
    $region31: #{tpu_custom_call.1} parent=1 // pred_check_branch
      %336 = sbr.rel (0) target = $region33
    $region32: #{tpu_custom_call.1} parent=1 // pred_region
      %338 = vsyncadd [#allocation9], 0
      %s340 = sshll.u32 [#allocation10], 4
      %s341 = int_to_ptr.vmem [resolvable:$true] %s340
      %s342 = sshll.u32 %s4, 4
      %s343 = int_to_ptr.hbm [resolvable:$true] %s342
      %345 = dma.vmem_to_hbm [thread:$0]  %s341, 16, %s343, [#allocation9]
    $region33: #{tpu_custom_call.1} parent=1 // pred_fallthru
      _
    // Predicated region
    $region34: #{tpu_custom_call.1} parent=1 // pred_check
      _
    $region35: #{tpu_custom_call.1} parent=1 // pred_check_branch
      %347 = sbr.rel (0) target = $region37
    $region36: #{tpu_custom_call.1} parent=1 // pred_region
      %349 = dma.done [#allocation4], 2048
    $region37: #{tpu_custom_call.1} parent=1 // pred_fallthru
      _
    // Predicated region
    $region38: #{tpu_custom_call.1} parent=1 // pred_check
      _
    $region39: #{tpu_custom_call.1} parent=1 // pred_check_branch
      %351 = sbr.rel (0) target = $region41
    $region40: #{tpu_custom_call.1} parent=1 // pred_region
      %353 = dma.done [#allocation9], 16
    $region41: #{tpu_custom_call.1} parent=1 // pred_fallthru
      _
    // Predicated region
    $region42: #{tpu_custom_call.1} parent=1 // pred_check
      _
    $region43: #{tpu_custom_call.1} parent=1 // pred_check_branch
      %355 = sbr.rel (0) target = $region45
    $region44: #{tpu_custom_call.1} parent=1 // pred_region
      %357 = dma.done [#allocation9], 16
    $region45: #{tpu_custom_call.1} parent=1 // pred_fallthru
      _
    %358 = vsyncpa [#allocation3], 1
    %359 = vsyncpa [#allocation6], 1
    %360 = vsyncpa [#allocation4], 1
    %361 = vsyncpa [#allocation9], 1

</llo_original>
